<compile_context>
chip_gen: v7x
topology: tpu7x:2x2x1
jax: 0.10.0
libtpu: 0.0.40
codegen_flags: <defaults>
</compile_context>

<pallas_src>
import functools

import jax
import jax.numpy as jnp
from jax.experimental import pallas as pl
from jax.experimental.pallas import tpu as pltpu

LANE = 128
SUBLANE = 8


# ---------------------------------------------------------------------------
# helpers
# ---------------------------------------------------------------------------
def _round_up(x: int, m: int) -> int:
    return ((x + m - 1) // m) * m


def _vmem_capacity_bytes() -> int:
    """Generation-aware VMEM capacity (falls back to the v7x 64 MiB floor)."""
    try:
        return int(pltpu.get_tpu_info().vmem_capacity_bytes)
    except Exception:
        return 64 << 20


def _largest_divisor_tile(n: int, row_bytes: int, fixed_bytes: int,
                          budget: int) -> int:
    """Largest divisor t of n (t % 8 == 0) whose working set fits the budget."""
    if n <= SUBLANE or n % SUBLANE != 0:
        return n
    best = SUBLANE
    for t in range(SUBLANE, n + 1, SUBLANE):
        if n % t == 0 and fixed_bytes + t * row_bytes <= budget:
            best = t
    return best


# ---------------------------------------------------------------------------
# Stage A: per-relation feature transform   Y[b, r] = x @ Wx_r + rel_proj[b, r]
# ---------------------------------------------------------------------------
def _feature_transform_kernel(x_ref, wx_ref, relp_ref, y_ref):
    # x_ref    : (1, tm, Din)    node-feature row tile
    # wx_ref   : (1, Din, Dp)    per-relation node-feature weight slab
    # relp_ref : (1, 1, 1, Dp)   rel_r @ Wrel_r  (rank-1 relation correction)
    # y_ref    : (1, 1, tm, Dp)  transformed features for this relation
    y = jnp.dot(x_ref[0], wx_ref[0], preferred_element_type=jnp.float32)
    y_ref[0, 0] = (y + relp_ref[0, 0]).astype(y_ref.dtype)


# ---------------------------------------------------------------------------
# Stage B: neighbour aggregation   out = sum_r adj_r @ Y_r + bias ; activation
# ---------------------------------------------------------------------------
def _aggregate_kernel(adj_ref, y_ref, b_ref, out_ref, *, sigmoid_out: bool):
    # adj_ref : (1, 1, tn, Np)   this relation's adjacency row tile
    # y_ref   : (1, 1, Np, Dp)   this relation's transformed features
    # b_ref   : (1, Dp)          bias
    # out_ref : (1, tn, Dp) f32  output row tile (resident across r => accumulator)
    r = pl.program_id(2)

    @pl.when(r == 0)
    def _():
        out_ref[...] = jnp.zeros_like(out_ref)

    out_ref[0] += jnp.dot(adj_ref[0, 0], y_ref[0, 0],
                          preferred_element_type=jnp.float32)

    @pl.when(r == pl.num_programs(2) - 1)
    def _():
        o = out_ref[0] + b_ref[...]
        o = jax.nn.sigmoid(o) if sigmoid_out else jnp.maximum(o, 0.0)
        out_ref[0] = o.astype(out_ref.dtype)


# ---------------------------------------------------------------------------
# One RelationalGraphConvolution layer
# ---------------------------------------------------------------------------
def rgcn_layer_pallas(x, rel, adj, weight, bias, *, real_valued_graph=False,
                      compute_dtype=jnp.float32):
    """x: (B, N, Din); rel: (B, R, L); adj: (B, R, N, N);
    weight: (Dout, R*(Din+L)) (torch Linear weight, composed if num_bases>0);
    bias: (Dout,)."""
    B, N, Din = x.shape
    _, R, L = rel.shape
    Dout = weight.shape[0]
    K = Din + L
    assert weight.shape == (Dout, R * K)
    assert adj.shape == (B, R, N, N)

    out_dtype = x.dtype
    cbytes = jnp.dtype(compute_dtype).itemsize

    # ---- wrapper-side weight prep (tiny, once per layer) --------------------
    w_all = jnp.transpose(weight).reshape(R, K, Dout)   # W_r = W^T[r*K:(r+1)*K, :]
    wx = w_all[:, :Din, :]                              # (R, Din, Dout)
    wrel = w_all[:, Din:, :]                            # (R, L,   Dout)
    # rank-1 relation correction replaces the concat + broadcast of the original
    rel_proj = jnp.einsum("brl,rld->brd", rel, wrel)    # (B, R, Dout)

    # ---- lane-dense output padding (Dout -> multiple of 128) ----------------
    Dp = _round_up(Dout, LANE)
    if Dp != Dout:
        wx = jnp.pad(wx, ((0, 0), (0, 0), (0, Dp - Dout)))
        rel_proj = jnp.pad(rel_proj, ((0, 0), (0, 0), (0, Dp - Dout)))
        bias_p = jnp.pad(bias, (0, Dp - Dout))
    else:
        bias_p = bias

    # ---- sublane padding of the node axis ------------------------------------
    Np = _round_up(N, SUBLANE)
    if Np != N:
        x = jnp.pad(x, ((0, 0), (0, Np - N), (0, 0)))
        adj = jnp.pad(adj, ((0, 0), (0, 0), (0, Np - N), (0, Np - N)))

    x_c = x.astype(compute_dtype)
    adj_c = adj.astype(compute_dtype)
    wx_c = wx.astype(compute_dtype)
    relp = rel_proj.reshape(B, R, 1, Dp).astype(compute_dtype)
    bias2 = bias_p.reshape(1, Dp).astype(jnp.float32)

    cap = _vmem_capacity_bytes()
    budget = cap // 2                 # tile-selection budget (leave pipeline headroom)
    vmem_limit = int(cap * 0.75)      # raised scoped-VMEM limit, below physical

    # ================= Stage A: per-relation feature transform ===============
    tm = _largest_divisor_tile(
        Np,
        row_bytes=2 * Din * cbytes + 2 * Dp * cbytes,   # x tile + Y tile (double-buffered)
        fixed_bytes=2 * Din * Dp * cbytes,              # weight slab (double-buffered)
        budget=budget)

    y = pl.pallas_call(
        _feature_transform_kernel,
        out_shape=jax.ShapeDtypeStruct((B, R, Np, Dp), compute_dtype),
        grid_spec=pltpu.PrefetchScalarGridSpec(
            num_scalar_prefetch=0,
            grid=(B, R, Np // tm),
            in_specs=[
                pl.BlockSpec((1, tm, Din), lambda b, r, m: (b, m, 0)),    # x row tile
                pl.BlockSpec((1, Din, Dp), lambda b, r, m: (r, 0, 0)),    # Wx_r (resident over m)
                pl.BlockSpec((1, 1, 1, Dp), lambda b, r, m: (b, r, 0, 0)),  # rel_proj
            ],
            out_specs=pl.BlockSpec((1, 1, tm, Dp), lambda b, r, m: (b, r, m, 0)),
        ),
        compiler_params=pltpu.CompilerParams(
            dimension_semantics=("parallel", "parallel", "parallel"),
            vmem_limit_bytes=vmem_limit),
    )(x_c, wx_c, relp)

    # ================= Stage B: aggregation + bias + activation ==============
    tn = _largest_divisor_tile(
        Np,
        row_bytes=2 * Np * cbytes + 2 * Dp * 4,         # adj tile + f32 out tile
        fixed_bytes=2 * Np * Dp * cbytes,               # Y_r block (double-buffered)
        budget=budget)
    # TODO(synk): for huge N where even tn=8 exceeds the budget, a K-tiled (column)
    # grid axis over Np would be needed; not required at these shapes.

    kern = functools.partial(_aggregate_kernel, sigmoid_out=real_valued_graph)
    out = pl.pallas_call(
        kern,
        out_shape=jax.ShapeDtypeStruct((B, Np, Dp), jnp.float32),
        grid_spec=pltpu.PrefetchScalarGridSpec(
            num_scalar_prefetch=0,
            grid=(B, Np // tn, R),
            in_specs=[
                pl.BlockSpec((1, 1, tn, Np), lambda b, i, r: (b, r, i, 0)),  # adj row tile
                pl.BlockSpec((1, 1, Np, Dp), lambda b, i, r: (b, r, 0, 0)),  # Y_r
                pl.BlockSpec((1, Dp), lambda b, i, r: (0, 0)),               # bias (resident)
            ],
            out_specs=pl.BlockSpec((1, tn, Dp), lambda b, i, r: (b, i, 0)),
        ),
        compiler_params=pltpu.CompilerParams(
            dimension_semantics=("parallel", "parallel", "arbitrary"),
            vmem_limit_bytes=vmem_limit),
    )(adj_c, y, bias2)

    return out[:, :N, :Dout].astype(out_dtype)


def stacked_rgcn_pallas(node_features, relation_features, adj, layer_params, *,
                        real_valued_graph=False, compute_dtype=jnp.float32):
    """StackedRelationalGraphConvolution.forward (default config)."""
    # TODO(synk): use_highway_connections=True (per-layer gate linears) and
    # training-mode dropout are not implemented; defaults (False, rate=0.0) are exact.
    x = node_features
    for (w, b) in layer_params:
        x = rgcn_layer_pallas(x, relation_features, adj, w, b,
                              real_valued_graph=real_valued_graph,
                              compute_dtype=compute_dtype)
    return x


# ---------------------------------------------------------------------------
# Parameter init (mirrors the PyTorch module's shapes / xavier init)
# ---------------------------------------------------------------------------
def _xavier_uniform(key, shape):
    fan_out, fan_in = shape
    bound = (6.0 / (fan_in + fan_out)) ** 0.5
    return jax.random.uniform(key, shape, jnp.float32, minval=-bound, maxval=bound)


def init_stacked_rgcn_params(key, entity_input_dim, relation_input_dim,
                             num_relations, hidden_dims, num_bases=0):
    params = []
    in_dim = entity_input_dim
    for h in hidden_dims:
        key, kw, kw2, kb = jax.random.split(key, 4)
        fan_in = num_relations * (in_dim + relation_input_dim)
        if num_bases > 0:
            # bottleneck (num_bases, fan_in) followed by (h, num_bases): exact
            # pre-composition into a single (h, fan_in) weight.
            wb = _xavier_uniform(kw, (num_bases, fan_in))
            ww = _xavier_uniform(kw2, (h, num_bases))
            w = ww @ wb
        else:
            w = _xavier_uniform(kw, (h, fan_in))
        # PyTorch fills bias with 0; use a small nonzero bias so the path is tested.
        b = 0.1 * jax.random.normal(kb, (h,), jnp.float32)
        params.append((w, b))
        in_dim = h
    return params


# ---------------------------------------------------------------------------
# Pure-JAX reference (mirrors the PyTorch forward literally)
# ---------------------------------------------------------------------------
def rgcn_layer_ref(x, rel, adj, weight, bias, *, real_valued_graph=False):
    B, N, _ = x.shape
    _, R, L = rel.shape
    supports = []
    for r in range(R):
        r_feat = jnp.broadcast_to(rel[:, r:r + 1, :], (B, N, L))
        cat = jnp.concatenate([x, r_feat], axis=-1)
        supports.append(jnp.einsum("bij,bjk->bik", adj[:, r], cat))
    supports = jnp.concatenate(supports, axis=-1)
    out = supports @ weight.T + bias
    return jax.nn.sigmoid(out) if real_valued_graph else jnp.maximum(out, 0.0)


def stacked_rgcn_ref(x, rel, adj, layer_params, *, real_valued_graph=False):
    for (w, b) in layer_params:
        x = rgcn_layer_ref(x, rel, adj, w, b, real_valued_graph=real_valued_graph)
    return x


# ---------------------------------------------------------------------------
if __name__ == "__main__":
    B = 2                    # batch
    N = 8                    # number of entities / nodes
    entity_input_dim = 16
    relation_input_dim = 8
    num_relations = 3
    hidden_dims = (32, 32)
    num_bases = 0            # default "no bottleneck" branch

    key = jax.random.PRNGKey(0)
    k1, k2, k3, kp = jax.random.split(key, 4)

    node_features = jax.random.normal(k1, (B, N, entity_input_dim), jnp.float32)
    relation_features = jax.random.normal(
        k2, (B, num_relations, relation_input_dim), jnp.float32)
    adj = jax.random.uniform(k3, (B, num_relations, N, N), jnp.float32)

    params = init_stacked_rgcn_params(
        kp, entity_input_dim, relation_input_dim, num_relations,
        hidden_dims, num_bases)

    out = stacked_rgcn_pallas(node_features, relation_features, adj, params)
    out = jax.block_until_ready(out)

    ref = stacked_rgcn_ref(node_features, relation_features, adj, params)
    assert out.shape == (B, N, hidden_dims[-1]), out.shape
    max_err = float(jnp.max(jnp.abs(out - ref)))
    assert jnp.allclose(out, ref, atol=2e-4, rtol=2e-4), max_err

    print("KERNEL_OK")
</pallas_src>

<mosaic_0001>
module attributes {stable_mosaic.version = 11 : i64} {
  func.func @_feature_transform_kernel(%arg0: i32, %arg1: i32, %arg2: i32, %arg3: memref<1x8x16xf32, #tpu.memory_space<vmem>>, %arg4: memref<1x16x128xf32, #tpu.memory_space<vmem>>, %arg5: memref<1x1x1x128xf32, #tpu.memory_space<vmem>>, %arg6: memref<1x1x8x128xf32, #tpu.memory_space<vmem>>) attributes {dimension_semantics = [#tpu.dimension_semantics<parallel>, #tpu.dimension_semantics<parallel>, #tpu.dimension_semantics<parallel>], iteration_bounds = array<i64: 2, 3, 1>, scalar_prefetch = 0 : i64, scratch_operands = 0 : i64, tpu.core_type = #tpu.core_type<tc>, window_params = [{transform_indices = @transform_0, window_bounds = array<i64: 1, 8, 16>}, {transform_indices = @transform_1, window_bounds = array<i64: 1, 16, 128>}, {transform_indices = @transform_2, window_bounds = array<i64: 1, 1, 1, 128>}, {transform_indices = @transform_3, window_bounds = array<i64: 1, 1, 8, 128>}]} {
    %c0 = arith.constant 0 : index
    %c0_0 = arith.constant 0 : index
    %c0_1 = arith.constant 0 : index
    %0 = vector.load %arg3[%c0, %c0_0, %c0_1] : memref<1x8x16xf32, #tpu.memory_space<vmem>>, vector<1x8x16xf32>
    %1 = vector.shape_cast %0 : vector<1x8x16xf32> to vector<8x16xf32>
    %c0_2 = arith.constant 0 : index
    %c0_3 = arith.constant 0 : index
    %c0_4 = arith.constant 0 : index
    %2 = vector.load %arg4[%c0_2, %c0_3, %c0_4] : memref<1x16x128xf32, #tpu.memory_space<vmem>>, vector<1x16x128xf32>
    %3 = vector.shape_cast %2 : vector<1x16x128xf32> to vector<16x128xf32>
    %cst = arith.constant dense<0.000000e+00> : vector<8x128xf32>
    %4 = tpu.matmul %1, %3, %cst {dimension_numbers = #tpu.dot_dimension_numbers<[1], [0], [0], [1], [0, 0, 1, 1], [], []>} : vector<8x16xf32>, vector<16x128xf32>, vector<8x128xf32> -> vector<8x128xf32>
    %c0_5 = arith.constant 0 : index
    %c0_6 = arith.constant 0 : index
    %c0_7 = arith.constant 0 : index
    %c0_8 = arith.constant 0 : index
    %5 = vector.load %arg5[%c0_5, %c0_6, %c0_7, %c0_8] : memref<1x1x1x128xf32, #tpu.memory_space<vmem>>, vector<1x1x1x128xf32>
    %6 = vector.shape_cast %5 : vector<1x1x1x128xf32> to vector<1x128xf32>
    %7 = vector.broadcast %6 : vector<1x128xf32> to vector<8x128xf32>
    %8 = arith.addf %4, %7 : vector<8x128xf32>
    %c0_9 = arith.constant 0 : index
    %c0_10 = arith.constant 0 : index
    %c0_11 = arith.constant 0 : index
    %c0_12 = arith.constant 0 : index
    %9 = vector.load %arg6[%c0_9, %c0_10, %c0_11, %c0_12] : memref<1x1x8x128xf32, #tpu.memory_space<vmem>>, vector<1x1x8x128xf32>
    %10 = vector.shape_cast %9 : vector<1x1x8x128xf32> to vector<8x128xf32>
    %11 = vector.shape_cast %8 : vector<8x128xf32> to vector<1x1x8x128xf32>
    tpu.vector_store %arg6[%c0_9, %c0_10, %c0_11, %c0_12], %11 {strides = array<i32>} : memref<1x1x8x128xf32, #tpu.memory_space<vmem>>, vector<1x1x8x128xf32>,
    return
  }
  func.func @transform_0(%arg0: i32, %arg1: i32, %arg2: i32) -> (i32, i32, i32) {
    %c0_i32 = arith.constant 0 : i32
    %c0_i32_0 = arith.constant 0 : i32
    return %arg0, %arg2, %c0_i32 : i32, i32, i32
  }
  func.func @transform_1(%arg0: i32, %arg1: i32, %arg2: i32) -> (i32, i32, i32) {
    %c0_i32 = arith.constant 0 : i32
    %c0_i32_0 = arith.constant 0 : i32
    %c0_i32_1 = arith.constant 0 : i32
    return %arg1, %c0_i32, %c0_i32_0 : i32, i32, i32
  }
  func.func @transform_2(%arg0: i32, %arg1: i32, %arg2: i32) -> (i32, i32, i32, i32) {
    %c0_i32 = arith.constant 0 : i32
    %c0_i32_0 = arith.constant 0 : i32
    %c0_i32_1 = arith.constant 0 : i32
    return %arg0, %arg1, %c0_i32, %c0_i32_0 : i32, i32, i32, i32
  }
  func.func @transform_3(%arg0: i32, %arg1: i32, %arg2: i32) -> (i32, i32, i32, i32) {
    %c0_i32 = arith.constant 0 : i32
    %c0_i32_0 = arith.constant 0 : i32
    return %arg0, %arg1, %arg2, %c0_i32 : i32, i32, i32, i32
  }
}

</mosaic_0001>

<llo_original>
// kernel: tpu_custom_call.1
$region0: #{tpu_custom_call.1}
  #allocation0 [shape = 'u32[]', space=smem, size = 0x4, offset = 0x4, fixed_abs, tag = 'smem constant byte address 0x4 - core index']
  #allocation1 [shape = 'u32[144,128]{1,0:T(1,128)}', space=vmem, size = 0x12000, scoped, tag = 'internal scratch']
  %s0 = inlined_call_operand.hbm [shape: f32[2,8,16], index: 0, kind: input, shape index: {}]
  %s1 = inlined_call_operand.hbm [shape: f32[3,16,128], index: 1, kind: input, shape index: {}]
  %s2 = inlined_call_operand.vmem [shape: f32[2,3,1,128], index: 2, kind: input, shape index: {}]
  %s3 = inlined_call_operand.hbm [shape: f32[2,3,8,128], index: 3, kind: output, shape index: {}]
  %s4 = sld [smem:[#allocation0]]
  $region53: #{tpu_custom_call.1} parent=0
    _
  %s6 = ssub.s32 1, %s4
  %s7 = scalar_select 0, %s6, %s4
  $region1: #{tpu_custom_call.1} parent=0
    #allocation2 [shape = 'u8[8192]{0}', space=vmem, size = 0x2000, scoped, tag = 'input window, operand 0']
    #allocation3 [shape = 's32[2]{0}', space=sflag, size = 0x8, scoped, tag = 'scoped memory for tpu_custom_call.1']
    #allocation4 [shape = 's32[2]{0}', space=sflag, size = 0x8, scoped, tag = 'scoped memory for tpu_custom_call.1']
    #allocation5 [shape = 'u8[16384]{0}', space=vmem, size = 0x4000, scoped, tag = 'input window, operand 1']
    #allocation6 [shape = 's32[2]{0}', space=sflag, size = 0x8, scoped, tag = 'scoped memory for tpu_custom_call.1']
    #allocation7 [shape = 'u8[8192]{0}', space=vmem, size = 0x2000, scoped, tag = 'output window, operand 0']
    %8 = vsyncpa [#allocation3], 0
    %s9 = scalar_lea.sflag [#allocation3], 1
    %10 = vsyncpa %s9, 0
    %11 = vsyncpa [#allocation6], 0
    %s12 = scalar_lea.sflag [#allocation6], 1
    %13 = vsyncpa %s12, 0
    %14 = vsyncpa [#allocation4], 0
    %s15 = scalar_lea.sflag [#allocation4], 1
    %16 = vsyncpa %s15, 0
    loop: start=0, step=1, limit=8
    $region2: #{tpu_custom_call.1} parent=1 // loop_pre_header
      _
    $region3: #{tpu_custom_call.1} parent=1 // loop_header
      %s18 = sphi 0, %s22
      %p19 = scmp.ge.s32.totalorder %s18, 8
      %s25 = sphi 0, %s44
      %s26 = sphi 0, %s40
      %s27 = sphi 0, %s36
      %s28 = sphi 0, %s25
      %s29 = sphi 0, %s26
      %s30 = sphi 0, %s27
      %s31 = sphi 0, %s28
      %s32 = sphi 0, %s29
      %s33 = sphi 0, %s30
      %s49 = sphi 0, %s51
      %s52 = sphi 0, %s49
      %s53 = sphi 0, %s52
      %s69 = sphi 0, %s53
      %s75 = sphi 0, %s77
      %s78 = sphi 0, %s75
      %s79 = sphi 0, %s78
      %s95 = sphi 0, %s79
      %s103 = sphi 0, %s105
      %s106 = sphi 0, %s103
      %s107 = sphi 0, %s106
      %s123 = sphi 0, %s107
      %s133 = sphi 0, %s135
      %s136 = sphi 0, %s133
      %s137 = sphi 0, %s136
      %s153 = sphi 0, %s137
    $region4: #{tpu_custom_call.1} parent=1 // loop_header_branch
      %21 = sbr.rel (%p19) target = $region8
    $region5: #{tpu_custom_call.1} parent=1 // loop_body
      %s23 = ssub.s32 %s18, 1
      %s24 = ssub.s32 %s18, 2
      %s34 = sadd.s32 1, %s27
      %p35 = scmp.ge.s32.totalorder %s34, 1
      %s36 = scalar_select %p35, 0, %s34
      %s37 = sadd.s32 1, %s26
      %s38 = scalar_select %p35, %s37, %s26
      %p39 = scmp.ge.s32.totalorder %s38, 3
      %s40 = scalar_select %p39, 0, %s38
      %s41 = sadd.s32 1, %s25
      %s42 = scalar_select %p39, %s41, %s25
      %p43 = scmp.ge.s32.totalorder %s42, 2
      %s44 = scalar_select %p43, 0, %s42
      %s45 = ssub.s32 %s25, %s44
      %s46 = ssub.s32 %s27, %s36
      %s47 = sor.u32 %s45, %s46
      %p48 = scmp.eq.s32.totalorder %s47, 0
      %s50 = sadd.s32 %s49, 1
      %s51 = scalar_select %p48, %s49, %s50
      %p54 = pneg %p48
      %p55 = scmp.eq.s32.totalorder %s18, 5
      %p56 = por %p54, %p55
      %p57 = scmp.ne.s32.totalorder %s49, %s52
      %p58 = scmp.eq.s32.totalorder %s18, 0
      %p59 = por %p57, %p58
      %p60 = scmp.ne.s32.totalorder %s49, %s52
      %p61 = scmp.eq.s32.totalorder %s23, 5
      %p62 = por %p60, %p61
      %p63 = scmp.ne.s32.totalorder %s52, %s53
      %p64 = scmp.eq.s32.totalorder %s23, 0
      %p65 = por %p63, %p64
      %p66 = scmp.ne.s32.totalorder %s52, %s53
      %p67 = scmp.eq.s32.totalorder %s24, 5
      %p68 = por %p66, %p67
      %p70 = scmp.ne.s32.totalorder %s53, %s69
      %p71 = scmp.eq.s32.totalorder %s24, 0
      %p72 = por %p70, %p71
      %s73 = ssub.s32 %s26, %s40
      %p74 = scmp.eq.s32.totalorder %s73, 0
      %s76 = sadd.s32 %s75, 1
      %s77 = scalar_select %p74, %s75, %s76
      %p80 = pneg %p74
      %p81 = scmp.eq.s32.totalorder %s18, 5
      %p82 = por %p80, %p81
      %p83 = scmp.ne.s32.totalorder %s75, %s78
      %p84 = scmp.eq.s32.totalorder %s18, 0
      %p85 = por %p83, %p84
      %p86 = scmp.ne.s32.totalorder %s75, %s78
      %p87 = scmp.eq.s32.totalorder %s23, 5
      %p88 = por %p86, %p87
      %p89 = scmp.ne.s32.totalorder %s78, %s79
      %p90 = scmp.eq.s32.totalorder %s23, 0
      %p91 = por %p89, %p90
      %p92 = scmp.ne.s32.totalorder %s78, %s79
      %p93 = scmp.eq.s32.totalorder %s24, 5
      %p94 = por %p92, %p93
      %p96 = scmp.ne.s32.totalorder %s79, %s95
      %p97 = scmp.eq.s32.totalorder %s24, 0
      %p98 = por %p96, %p97
      %s99 = ssub.s32 %s25, %s44
      %s100 = ssub.s32 %s26, %s40
      %s101 = sor.u32 %s99, %s100
      %p102 = scmp.eq.s32.totalorder %s101, 0
      %s104 = sadd.s32 %s103, 1
      %s105 = scalar_select %p102, %s103, %s104
      %p108 = pneg %p102
      %p109 = scmp.eq.s32.totalorder %s18, 5
      %p110 = por %p108, %p109
      %p111 = scmp.ne.s32.totalorder %s103, %s106
      %p112 = scmp.eq.s32.totalorder %s18, 0
      %p113 = por %p111, %p112
      %p114 = scmp.ne.s32.totalorder %s103, %s106
      %p115 = scmp.eq.s32.totalorder %s23, 5
      %p116 = por %p114, %p115
      %p117 = scmp.ne.s32.totalorder %s106, %s107
      %p118 = scmp.eq.s32.totalorder %s23, 0
      %p119 = por %p117, %p118
      %p120 = scmp.ne.s32.totalorder %s106, %s107
      %p121 = scmp.eq.s32.totalorder %s24, 5
      %p122 = por %p120, %p121
      %p124 = scmp.ne.s32.totalorder %s107, %s123
      %p125 = scmp.eq.s32.totalorder %s24, 0
      %p126 = por %p124, %p125
      %s127 = ssub.s32 %s25, %s44
      %s128 = ssub.s32 %s26, %s40
      %s129 = sor.u32 %s127, %s128
      %s130 = ssub.s32 %s27, %s36
      %s131 = sor.u32 %s129, %s130
      %p132 = scmp.eq.s32.totalorder %s131, 0
      %s134 = sadd.s32 %s133, 1
      %s135 = scalar_select %p132, %s133, %s134
      %p138 = pneg %p132
      %p139 = scmp.eq.s32.totalorder %s18, 5
      %p140 = por %p138, %p139
      %p141 = scmp.ne.s32.totalorder %s133, %s136
      %p142 = scmp.eq.s32.totalorder %s18, 0
      %p143 = por %p141, %p142
      %p144 = scmp.ne.s32.totalorder %s133, %s136
      %p145 = scmp.eq.s32.totalorder %s23, 5
      %p146 = por %p144, %p145
      %p147 = scmp.ne.s32.totalorder %s136, %s137
      %p148 = scmp.eq.s32.totalorder %s23, 0
      %p149 = por %p147, %p148
      %p150 = scmp.ne.s32.totalorder %s136, %s137
      %p151 = scmp.eq.s32.totalorder %s24, 5
      %p152 = por %p150, %p151
      %p154 = scmp.ne.s32.totalorder %s137, %s153
      %p155 = scmp.eq.s32.totalorder %s24, 0
      %p156 = por %p154, %p155
      %p157 = scmp.le.s32.totalorder 1, %s18
      %p158 = scmp.lt.s32.totalorder %s18, 7
      %p159 = pnand %p157, %p158
      %p160 = pneg %p159
      // Predicated region
      $region9: #{tpu_custom_call.1} parent=5 // pred_check
        _
      $region10: #{tpu_custom_call.1} parent=5 // pred_check_branch
        %162 = sbr.rel (%p159) target = $region12
      $region11: #{tpu_custom_call.1} parent=5 // pred_region
        %s163 = ssub.s32 %s18, 1
      $region12: #{tpu_custom_call.1} parent=5 // pred_fallthru
        _
      %p164 = scmp.lt.s32.totalorder %s18, 6
      // Predicated region
      $region13: #{tpu_custom_call.1} parent=5 // pred_check
        %p165 = pneg %p164
      $region14: #{tpu_custom_call.1} parent=5 // pred_check_branch
        %167 = sbr.rel (%p165) target = $region16
      $region15: #{tpu_custom_call.1} parent=5 // pred_region
        // Predicated region
        $region17: #{tpu_custom_call.1} parent=15 // pred_check
          %p168 = pneg %p59
        $region18: #{tpu_custom_call.1} parent=15 // pred_check_branch
          %170 = sbr.rel (%p168) target = $region20
        $region19: #{tpu_custom_call.1} parent=15 // pred_region
          %s171 = sand.u32 %s49, 1
          %s172 = scalar_lea.sflag [#allocation3], %s171
          %s173 = sand.u32 %s49, 1
          %s174 = smul.addr %s173, 8
          %s175 = scalar_lea.vmem [#allocation2], %s174
          %s177 = ssub.s32 128, 128
          %178 = vsyncadd %s172, %s177
          %s179 = sadd.s32 %s27, %s25
          %s180 = smul.addr %s179, 128
          %s181 = scalar_lea.hbm %s0, %s180
          %s183 = sshll.u32 %s175, 4
          %s184 = int_to_ptr.vmem [resolvable:$true] %s183
          %186 = dma.hbm_to_vmem [thread:$0]  %s181, 128, %s184, %s172
        $region20: #{tpu_custom_call.1} parent=15 // pred_fallthru
          _
        // Predicated region
        $region21: #{tpu_custom_call.1} parent=15 // pred_check
          %p187 = pneg %p85
        $region22: #{tpu_custom_call.1} parent=15 // pred_check_branch
          %189 = sbr.rel (%p187) target = $region24
        $region23: #{tpu_custom_call.1} parent=15 // pred_region
          %s190 = sand.u32 %s75, 1
          %s191 = scalar_lea.sflag [#allocation6], %s190
          %s192 = sand.u32 %s75, 1
          %s193 = smul.addr %s192, 16
          %s194 = scalar_lea.vmem [#allocation5], %s193
          %s196 = ssub.s32 256, 256
          %197 = vsyncadd %s191, %s196
          %s198 = smul.addr %s26, 2
          %s199 = smul.addr %s198, 128
          %s200 = scalar_lea.hbm %s1, %s199
          %s201 = sshll.u32 %s194, 4
          %s202 = int_to_ptr.vmem [resolvable:$true] %s201
          %207 = dma.hbm_to_vmem [thread:$0]  %s200, 256, %s202, %s191, 128, 128, 8
        $region24: #{tpu_custom_call.1} parent=15 // pred_fallthru
          _
        // Predicated region
        $region25: #{tpu_custom_call.1} parent=15 // pred_check
          %p208 = pneg %p113
        $region26: #{tpu_custom_call.1} parent=15 // pred_check_branch
          %210 = sbr.rel (%p208) target = $region28
        $region27: #{tpu_custom_call.1} parent=15 // pred_region
          %p211 = scmp.lt.s32.totalorder %s25, 1
          %s212 = scalar_select %p211, %s25, 1
          %p213 = scmp.lt.s32.totalorder %s26, 2
          %s214 = scalar_select %p213, %s26, 2
          %s215 = smul.addr %s212, 3
          %s216 = sadd.s32 %s214, %s215
          %s217 = scalar_lea.vmem %s2, %s216
        $region28: #{tpu_custom_call.1} parent=15 // pred_fallthru
          _
      $region16: #{tpu_custom_call.1} parent=5 // pred_fallthru
        _
      %p218 = scmp.le.s32.totalorder 1, %s18
      %p219 = scmp.lt.s32.totalorder %s18, 7
      %p220 = pnand %p218, %p219
      %p221 = pneg %p220
      // Predicated region
      $region29: #{tpu_custom_call.1} parent=5 // pred_check
        _
      $region30: #{tpu_custom_call.1} parent=5 // pred_check_branch
        %223 = sbr.rel (%p220) target = $region32
      $region31: #{tpu_custom_call.1} parent=5 // pred_region
        %s224 = ssub.s32 %s18, 1
        %s225 = sand.u32 %s52, 1
        %s226 = scalar_lea.sflag [#allocation3], %s225
        %s227 = sand.u32 %s52, 1
        %s228 = smul.addr %s227, 8
        %s229 = scalar_lea.vmem [#allocation2], %s228
        // Predicated region
        $region33: #{tpu_custom_call.1} parent=31 // pred_check
          %p230 = pneg %p65
        $region34: #{tpu_custom_call.1} parent=31 // pred_check_branch
          %232 = sbr.rel (%p230) target = $region36
        $region35: #{tpu_custom_call.1} parent=31 // pred_region
          %233 = dma.done %s226, 128
        $region36: #{tpu_custom_call.1} parent=31 // pred_fallthru
          _
        %s234 = sand.u32 %s78, 1
        %s235 = scalar_lea.sflag [#allocation6], %s234
        %s236 = sand.u32 %s78, 1
        %s237 = smul.addr %s236, 16
        %s238 = scalar_lea.vmem [#allocation5], %s237
        // Predicated region
        $region37: #{tpu_custom_call.1} parent=31 // pred_check
          %p239 = pneg %p91
        $region38: #{tpu_custom_call.1} parent=31 // pred_check_branch
          %241 = sbr.rel (%p239) target = $region40
        $region39: #{tpu_custom_call.1} parent=31 // pred_region
          %242 = dma.done %s235, 256
        $region40: #{tpu_custom_call.1} parent=31 // pred_fallthru
          _
        %s243 = sand.u32 %s52, 1
        %s244 = scalar_lea.sflag [#allocation3], %s243
        %s245 = sand.u32 %s52, 1
        %s246 = smul.addr %s245, 8
        %s247 = scalar_lea.vmem [#allocation2], %s246
        %p248 = pneg %p65
        %p249 = pneg %p62
        %s250 = sand.u32 %s78, 1
        %s251 = scalar_lea.sflag [#allocation6], %s250
        %s252 = sand.u32 %s78, 1
        %s253 = smul.addr %s252, 16
        %s254 = scalar_lea.vmem [#allocation5], %s253
        %p255 = pneg %p91
        %p256 = pneg %p88
        %p257 = scmp.lt.s32.totalorder %s28, 1
        %s258 = scalar_select %p257, %s28, 1
        %p259 = scmp.lt.s32.totalorder %s29, 2
        %s260 = scalar_select %p259, %s29, 2
        %s261 = smul.addr %s258, 3
        %s262 = sadd.s32 %s260, %s261
        %s263 = scalar_lea.vmem %s2, %s262
        %p264 = pneg %p119
        %p265 = pneg %p116
        %p266 = pneg %p149
        %p267 = pneg %p146
        %s268 = sand.u32 %s136, 1
        %s269 = scalar_lea.sflag [#allocation4], %s268
        %s270 = sand.u32 %s136, 1
        %s271 = smul.addr %s270, 8
        %s272 = scalar_lea.vmem [#allocation7], %s271
        %p273 = scmp.lt.s32.totalorder %s28, 1
        %s274 = scalar_select %p273, %s28, 1
        %p275 = scmp.lt.s32.totalorder %s29, 2
        %s276 = scalar_select %p275, %s29, 2
        %s277 = smul.addr %s274, 3
        %s278 = sadd.s32 %s276, %s277
        %s279 = scalar_lea.vmem %s2, %s278
        %v280 = vld [vmem:[%s229] sm:$0xff]
        %v281 = vld [vmem:[%s238] sm:$0xff]
        %v282 = vld [vmem:[%s238 + $0x8] sm:$0xff]
        %v283 = vld [vmem:[%s279] sm:$0x1]
        %v285 = vlaneseq
        %v286 = vshrl.u32 %v285, 7
        %v287 = vsub.s32 0, %v286
        %v288 = vrot.slane %v283, %v287
        %vm290 = vcmask 130048
        %v292 = vsel %vm290, %v280, 0
        %294 = vmatprep.subr.mxu0 0.0
        %295 = vmatpush1.msra.mxu0 %v281
        %296 = vmatprep.subr.mxu0 0.0
        %297 = vmatpush1.msra.mxu0 %v282
        %298 = vmatprep.subr.mxu0 0.0
        %299 = vmatpush1.msra.mxu0 0.0
        %300 = vmatprep.subr.mxu0 0.0
        %301 = vmatpush1.msra.mxu0 0.0
        %302 = vmatprep.subr.mxu0 0.0
        %303 = vmatpush1.msra.mxu0 0.0
        %304 = vmatprep.subr.mxu0 0.0
        %305 = vmatpush1.msra.mxu0 0.0
        %306 = vmatprep.subr.mxu0 0.0
        %307 = vmatpush1.msra.mxu0 0.0
        %308 = vmatprep.subr.mxu0 0.0
        %309 = vmatpush1.msra.mxu0 0.0
        %310 = vmatprep.subr.mxu0 0.0
        %311 = vmatpush1.msra.mxu0 0.0
        %312 = vmatprep.subr.mxu0 0.0
        %313 = vmatpush1.msra.mxu0 0.0
        %314 = vmatprep.subr.mxu0 0.0
        %315 = vmatpush1.msra.mxu0 0.0
        %316 = vmatprep.subr.mxu0 0.0
        %317 = vmatpush1.msra.mxu0 0.0
        %318 = vmatprep.subr.mxu0 0.0
        %319 = vmatpush1.msra.mxu0 0.0
        %320 = vmatprep.subr.mxu0 0.0
        %321 = vmatpush1.msra.mxu0 0.0
        %322 = vmatprep.subr.mxu0 0.0
        %323 = vmatpush1.msra.mxu0 0.0
        %324 = vmatprep.subr.mxu0 0.0
        %325 = vmatpush1.msra.mxu0 0.0
        %326 = vmatprep.subr.mxu0 0.0
        %327 = vmatpush1.msra.mxu0 0.0
        %328 = vmatprep.subr.mxu0 0.0
        %329 = vmatpush1.msra.mxu0 0.0
        %330 = vmatprep.subr.mxu0 0.0
        %331 = vmatpush1.msra.mxu0 0.0
        %332 = vmatprep.subr.mxu0 0.0
        %333 = vmatpush1.msra.mxu0 0.0
        %334 = vmatprep.subr.mxu0 0.0
        %335 = vmatpush1.msra.mxu0 0.0
        %336 = vmatprep.subr.mxu0 0.0
        %337 = vmatpush1.msra.mxu0 0.0
        %338 = vmatprep.subr.mxu0 0.0
        %339 = vmatpush1.msra.mxu0 0.0
        %340 = vmatprep.subr.mxu0 0.0
        %341 = vmatpush1.msra.mxu0 0.0
        %342 = vmatprep.subr.mxu0 0.0
        %343 = vmatpush1.msra.mxu0 0.0
        %344 = vmatprep.subr.mxu0 0.0
        %345 = vmatpush1.msra.mxu0 0.0
        %346 = vmatprep.subr.mxu0 0.0
        %347 = vmatpush1.msra.mxu0 0.0
        %348 = vmatprep.subr.mxu0 0.0
        %349 = vmatpush1.msra.mxu0 0.0
        %350 = vmatprep.subr.mxu0 0.0
        %351 = vmatpush1.msra.mxu0 0.0
        %352 = vmatprep.subr.mxu0 0.0
        %353 = vmatpush1.msra.mxu0 0.0
        %354 = vmatprep.subr.mxu0 0.0
        %355 = vmatpush1.msra.mxu0 0.0
        %356 = vmatprep.subr.mxu0 0.0
        %357 = vmatpush1.msra.mxu0 0.0
        %358 = vmatprep.mubr.f32.mxu0 0.0
        %359 = vmatmul.mubr.f32.gmra.mrb[0].mxu0 %v292
        %v360 = vpop.f32.mrb[0].mxu0
        %v361 = vadd.f32 %v288, %v360
        %v362 = vpop.f32.mrb[0].mxu0
        %363 = vdwg.mxu0
        %364 = vst [vmem:[%s272] sm:$0xff] %v361
        %s365 = sand.u32 %s136, 1
        %s366 = scalar_lea.sflag [#allocation4], %s365
        %s367 = sand.u32 %s136, 1
        %s368 = smul.addr %s367, 8
        %s369 = scalar_lea.vmem [#allocation7], %s368
        // Predicated region
        $region41: #{tpu_custom_call.1} parent=31 // pred_check
          %p370 = pneg %p146
        $region42: #{tpu_custom_call.1} parent=31 // pred_check_branch
          %372 = sbr.rel (%p370) target = $region44
        $region43: #{tpu_custom_call.1} parent=31 // pred_region
          %s374 = ssub.s32 128, 128
          %375 = vsyncadd %s366, %s374
          %s376 = sadd.s32 %s30, %s29
          %s377 = smul.addr %s28, 3
          %s378 = sadd.s32 %s376, %s377
          %s379 = smul.addr %s378, 128
          %s380 = scalar_lea.hbm %s3, %s379
          %s382 = sshll.u32 %s369, 4
          %s383 = int_to_ptr.vmem [resolvable:$true] %s382
          %385 = dma.vmem_to_hbm [thread:$0]  %s383, 128, %s380, %s366
        $region44: #{tpu_custom_call.1} parent=31 // pred_fallthru
          _
      $region32: #{tpu_custom_call.1} parent=5 // pred_fallthru
        _
      %p386 = scmp.le.s32.totalorder 2, %s18
      // Predicated region
      $region45: #{tpu_custom_call.1} parent=5 // pred_check
        %p387 = pneg %p386
      $region46: #{tpu_custom_call.1} parent=5 // pred_check_branch
        %389 = sbr.rel (%p387) target = $region48
      $region47: #{tpu_custom_call.1} parent=5 // pred_region
        %s390 = ssub.s32 %s18, 2
        // Predicated region
        $region49: #{tpu_custom_call.1} parent=47 // pred_check
          %p391 = pneg %p152
        $region50: #{tpu_custom_call.1} parent=47 // pred_check_branch
          %393 = sbr.rel (%p391) target = $region52
        $region51: #{tpu_custom_call.1} parent=47 // pred_region
          %s394 = sand.u32 %s137, 1
          %s395 = scalar_lea.sflag [#allocation4], %s394
          %s396 = sand.u32 %s137, 1
          %s397 = smul.addr %s396, 8
          %s398 = scalar_lea.vmem [#allocation7], %s397
          %399 = dma.done %s395, 128
        $region52: #{tpu_custom_call.1} parent=47 // pred_fallthru
          _
      $region48: #{tpu_custom_call.1} parent=5 // pred_fallthru
        _
    $region6: #{tpu_custom_call.1} parent=1 // loop_footer
      %s22 = sadd.s32 1, %s18
    $region7: #{tpu_custom_call.1} parent=1 // loop_footer_branch
      %17 = sbr.rel target = $region3
    $region8: #{tpu_custom_call.1} parent=1 // loop_exit
      _
    %400 = vsyncpa [#allocation3], 1
    %s401 = scalar_lea.sflag [#allocation3], 1
    %402 = vsyncpa %s401, 1
    %403 = vsyncpa [#allocation6], 1
    %s404 = scalar_lea.sflag [#allocation6], 1
    %405 = vsyncpa %s404, 1
    %406 = vsyncpa [#allocation4], 1
    %s407 = scalar_lea.sflag [#allocation4], 1
    %408 = vsyncpa %s407, 1

</llo_original>
